<compile_context>
chip_gen: v7x
topology: tpu7x:2x2x1
jax: 0.10.0
libtpu: 0.0.40
codegen_flags: <defaults>
</compile_context>

<pallas_src>
import functools

import jax
import jax.numpy as jnp
from jax import lax
from jax.experimental import pallas as pl
from jax.experimental.pallas import tpu as pltpu


def _round_up(x, m):
    return ((x + m - 1) // m) * m


def _vmem_budget():
    """(h double-buffer budget, vmem_limit_bytes), sized per TPU generation."""
    try:
        cap = int(pltpu.get_tpu_info().vmem_capacity_bytes)
    except Exception:
        cap = 64 * 1024 * 1024                       # v7x-conservative fallback
    h_budget = cap // 4                              # 16 MiB on v7x, 32 MiB on v5e/v6e
    vmem_limit = int(min(cap * 3 // 4, 96 * 1024 * 1024))
    return h_budget, vmem_limit


def _spatial_tiling(S, N, nf, itemsize, budget_bytes, min_blocks=1):
    """Pick (tile_s, num_blocks). tile_s is either the full S (single resident block) or a
    multiple of 128 whose double-buffered *physical* block fits `budget_bytes`."""
    nf_pad = _round_up(max(nf, 1), 8)                # f32 sublane padding of the block
    per_pos = 2 * N * nf_pad * itemsize              # x2: double-buffered input block
    max_tile = max(128, (budget_bytes // per_pos) // 128 * 128)
    if S <= max_tile and min_blocks <= 1:
        return S, 1                                  # whole spatial extent in one step
    tile = min(max_tile, _round_up(pl.cdiv(S, max(min_blocks, 1)), 128))
    tile = max(128, tile)
    return tile, pl.cdiv(S, tile)


def _spatial_max_kernel(h_ref, vmax_ref, *, S, tile_s, mask_tail):
    """Partial spatial max of one (N, nf, tile_s) block -> (1, N, nf)."""
    x = h_ref[...]                                                   # f32, lane-dense
    if mask_tail:                                                    # static: only if S % tile_s
        s = pl.program_id(0)
        lane = lax.broadcasted_iota(jnp.int32, x.shape, 2)
        x = jnp.where(s * tile_s + lane < S, x, -jnp.inf)
    vmax_ref[...] = jnp.max(x, axis=-1)[None]                        # XLU lane reduce


def _attention_epilogue_kernel(part_ref, wvu_ref, bvu_ref, ww_ref, bw_ref, yi_ref, out_ref, *, L):
    # Combine per-block partial maxes (elementwise max over the leading axis).
    v = jnp.max(part_ref[...], axis=0)                               # (N, nf) f32

    # Fused attention_V | attention_U projection: single (N, nf) @ (nf, 2L) matmul.
    vu = jnp.dot(v, wvu_ref[...], preferred_element_type=jnp.float32) + bvu_ref[...]
    gate = jnp.tanh(vu[:, :L]) * jax.nn.sigmoid(vu[:, L:])           # (N, L)

    # attention_W as a (1, L) row; contracting over L gives lane-dense (1, N) scores.
    scores = jnp.einsum("cl,nl->cn", ww_ref[...], gate,
                        preferred_element_type=jnp.float32)
    scores = scores + bw_ref[...] + 1e-07                            # (1, N)

    # Softmax over the instance (lane) axis, then attention-weighted bag score.
    m = jnp.max(scores, axis=-1, keepdims=True)
    e = jnp.exp(scores - m)
    attn = e / jnp.sum(e, axis=-1, keepdims=True)                    # (1, N)
    bag = jnp.sum(attn * yi_ref[...], axis=-1, keepdims=True)        # (1, 1)
    out_ref[...] = jnp.clip(bag, 1e-06, 1.0 - 1e-06)


def saliency_classifier(h, yhat_instance, params, *, tile_s=None):
    """h: (N, nf, H, W) f32; yhat_instance: (N,) f32. Returns (yhat_bag, yhat_instance)."""
    N, nf, H, W = h.shape
    S = H * W
    L = params["wv"].shape[1]

    h_flat = h.reshape(N, nf, S)                     # free reshape, native HBM layout
    h_budget, vmem_limit = _vmem_budget()

    # >=2 blocks (when there's enough spatial extent) lets v7x shard the stream over both TCs.
    min_blocks = 2 if S >= 256 else 1
    if tile_s is None:
        tile_s, num_blocks = _spatial_tiling(S, N, nf, h_flat.dtype.itemsize, h_budget, min_blocks)
    else:
        tile_s = int(tile_s)
        if tile_s >= S:
            tile_s, num_blocks = S, 1
        else:
            tile_s = max(128, (tile_s // 128) * 128)
            num_blocks = pl.cdiv(S, tile_s)
    mask_tail = (num_blocks * tile_s != S)

    # ---- Stage 1: streamed spatial max (parallel over spatial blocks). ----
    h_bytes = N * nf * S * h_flat.dtype.itemsize
    partial_max = pl.pallas_call(
        functools.partial(_spatial_max_kernel, S=S, tile_s=tile_s, mask_tail=mask_tail),
        out_shape=jax.ShapeDtypeStruct((num_blocks, N, nf), jnp.float32),
        grid_spec=pltpu.PrefetchScalarGridSpec(
            num_scalar_prefetch=0,
            grid=(num_blocks,),
            in_specs=[pl.BlockSpec((N, nf, tile_s), lambda s: (0, 0, s))],
            out_specs=pl.BlockSpec((1, N, nf), lambda s: (s, 0, 0)),
        ),
        compiler_params=pltpu.CompilerParams(
            dimension_semantics=("parallel",),       # independent partial maxes (both TCs on v7x)
            vmem_limit_bytes=vmem_limit,
        ),
        cost_estimate=pl.CostEstimate(
            flops=int(N * nf * S),
            transcendentals=0,
            bytes_accessed=int(h_bytes + num_blocks * N * nf * 4),
        ),
    )(h_flat)

    # ---- Stage 2: one-shot combine + gated attention + softmax + bag score. ----
    # Pack gated-attention weights (PyTorch Linear weights stored pre-transposed as (in, out)).
    wvu = jnp.concatenate([params["wv"], params["wu"]], axis=1).astype(jnp.float32)   # (nf, 2L)
    bvu = jnp.concatenate([params["bv"], params["bu"]], axis=1).astype(jnp.float32)   # (1, 2L)
    ww = params["ww"].reshape(1, L).astype(jnp.float32)                               # (1, L)
    bw = params["bw"].reshape(1, 1).astype(jnp.float32)                               # (1, 1)
    yi = yhat_instance.reshape(1, N).astype(jnp.float32)                              # (1, N)

    out = pl.pallas_call(
        functools.partial(_attention_epilogue_kernel, L=L),
        out_shape=jax.ShapeDtypeStruct((1, 1), jnp.float32),
        grid_spec=pltpu.PrefetchScalarGridSpec(
            num_scalar_prefetch=0,
            grid=(1,),
            in_specs=[
                pl.BlockSpec((num_blocks, N, nf), lambda i: (0, 0, 0)),   # partial maxes
                pl.BlockSpec((nf, 2 * L), lambda i: (0, 0)),              # packed V|U weight
                pl.BlockSpec((1, 2 * L), lambda i: (0, 0)),               # packed V|U bias
                pl.BlockSpec((1, L), lambda i: (0, 0)),                   # attention_W row
                pl.BlockSpec((1, 1), lambda i: (0, 0)),                   # attention_W bias
                pl.BlockSpec((1, N), lambda i: (0, 0)),                   # yhat_instance
            ],
            out_specs=pl.BlockSpec((1, 1), lambda i: (0, 0)),
        ),
        compiler_params=pltpu.CompilerParams(
            dimension_semantics=("arbitrary",),
            vmem_limit_bytes=vmem_limit,
        ),
    )(partial_max, wvu, bvu, ww, bw, yi)

    return out[0, 0], yhat_instance


def init_params(key, nf, L, num_classes=1):
    """Deterministic Linear params. PyTorch Linear weight is (out, in);
    stored pre-transposed as (in, out) for x @ W."""
    ks = jax.random.split(key, 6)

    def lin(kw, kb, fan_in, fan_out):
        bound = 1.0 / jnp.sqrt(fan_in)
        w = jax.random.uniform(kw, (fan_in, fan_out), jnp.float32, -bound, bound)
        b = jax.random.uniform(kb, (1, fan_out), jnp.float32, -bound, bound)
        return w, b

    wv, bv = lin(ks[0], ks[1], nf, L)
    wu, bu = lin(ks[2], ks[3], nf, L)
    ww, bw = lin(ks[4], ks[5], L, num_classes)
    return {"wv": wv, "bv": bv, "wu": wu, "bu": bu, "ww": ww, "bw": bw}


if __name__ == "__main__":
    key = jax.random.PRNGKey(0)
    # S = H*W = 400 -> two 128-multiple spatial blocks with a masked ragged tail:
    # exercises the parallel streaming path and the in-kernel tail mask.
    N, nf, H, W, L, C = 8, 32, 20, 20, 256, 1

    k_h, k_y, k_p = jax.random.split(key, 3)
    h = jax.random.normal(k_h, (N, nf, H, W), jnp.float32)
    yhat_instance = jax.nn.sigmoid(jax.random.normal(k_y, (N,), jnp.float32))
    params = init_params(k_p, nf, L, C)

    yhat_bag, yhat_inst_out = saliency_classifier(h, yhat_instance, params)
    yhat_bag = jax.block_until_ready(yhat_bag)
    jax.block_until_ready(yhat_inst_out)

    # Pure-JAX f32 reference (h is streamed in f32, no quantization).
    v = jnp.max(h.reshape(N, nf, -1), axis=-1)
    a_v = jnp.tanh(jnp.dot(v, params["wv"], precision="highest") + params["bv"])
    a_u = jax.nn.sigmoid(jnp.dot(v, params["wu"], precision="highest") + params["bu"])
    s = jnp.dot(a_v * a_u, params["ww"], precision="highest") + params["bw"] + 1e-07
    attn = jax.nn.softmax(s.squeeze(), axis=0)
    ref_bag = jnp.clip(jnp.sum(attn * yhat_instance), 1e-06, 1.0 - 1e-06)

    assert jnp.allclose(yhat_bag, ref_bag, atol=1e-3, rtol=1e-3), (yhat_bag, ref_bag)
    assert jnp.array_equal(yhat_inst_out, yhat_instance)

    print("KERNEL_OK")
</pallas_src>

<mosaic_0001>
module attributes {stable_mosaic.version = 11 : i64} {
  func.func @_spatial_max_kernel(%arg0: i32, %arg1: memref<8x32x256xf32, #tpu.memory_space<vmem>>, %arg2: memref<1x8x32xf32, #tpu.memory_space<vmem>>) attributes {dimension_semantics = [#tpu.dimension_semantics<parallel>], iteration_bounds = array<i64: 2>, scalar_prefetch = 0 : i64, scratch_operands = 0 : i64, tpu.core_type = #tpu.core_type<tc>, window_params = [{transform_indices = @transform_0, window_bounds = array<i64: 8, 32, 256>}, {transform_indices = @transform_1, window_bounds = array<i64: 1, 8, 32>}]} {
    %c0 = arith.constant 0 : index
    %c0_0 = arith.constant 0 : index
    %c0_1 = arith.constant 0 : index
    %0 = vector.load %arg1[%c0, %c0_0, %c0_1] : memref<8x32x256xf32, #tpu.memory_space<vmem>>, vector<8x32x256xf32>
    %1 = tpu.iota {dimensions = array<i32: 2>} : vector<8x32x256xi32>
    %c256_i32 = arith.constant 256 : i32
    %2 = arith.muli %arg0, %c256_i32 : i32
    %3 = vector.broadcast %2 : i32 to vector<8x32x256xi32>
    %4 = arith.addi %3, %1 : vector<8x32x256xi32>
    %c400_i32 = arith.constant 400 : i32
    %5 = vector.broadcast %c400_i32 : i32 to vector<8x32x256xi32>
    %6 = arith.cmpi slt, %4, %5 : vector<8x32x256xi32>
    %cst = arith.constant 0xFF800000 : f32
    %7 = vector.broadcast %cst : f32 to vector<8x32x256xf32>
    %8 = arith.select %6, %0, %7 : vector<8x32x256xi1>, vector<8x32x256xf32>
    %cst_2 = arith.constant dense<0xFF800000> : vector<8x32xf32>
    %9 = vector.multi_reduction <maximumf>, %8, %cst_2 [2] : vector<8x32x256xf32> to vector<8x32xf32>
    %10 = vector.shape_cast %9 : vector<8x32xf32> to vector<1x8x32xf32>
    %c0_3 = arith.constant 0 : index
    %c0_4 = arith.constant 0 : index
    %c0_5 = arith.constant 0 : index
    %11 = vector.load %arg2[%c0_3, %c0_4, %c0_5] : memref<1x8x32xf32, #tpu.memory_space<vmem>>, vector<1x8x32xf32>
    tpu.vector_store %arg2[%c0_3, %c0_4, %c0_5], %10 {strides = array<i32>} : memref<1x8x32xf32, #tpu.memory_space<vmem>>, vector<1x8x32xf32>,
    return
  }
  func.func @transform_0(%arg0: i32) -> (i32, i32, i32) {
    %c0_i32 = arith.constant 0 : i32
    %c0_i32_0 = arith.constant 0 : i32
    %c0_i32_1 = arith.constant 0 : i32
    return %c0_i32, %c0_i32_0, %arg0 : i32, i32, i32
  }
  func.func @transform_1(%arg0: i32) -> (i32, i32, i32) {
    %c0_i32 = arith.constant 0 : i32
    %c0_i32_0 = arith.constant 0 : i32
    %c0_i32_1 = arith.constant 0 : i32
    return %arg0, %c0_i32, %c0_i32_0 : i32, i32, i32
  }
}

</mosaic_0001>

<llo_original>
// kernel: tpu_custom_call.1
$region0: #{tpu_custom_call.1}
  #allocation0 [shape = 'u32[]', space=smem, size = 0x4, offset = 0x4, fixed_abs, tag = 'smem constant byte address 0x4 - core index']
  #allocation1 [shape = 'u32[144,128]{1,0:T(1,128)}', space=vmem, size = 0x12000, scoped, tag = 'internal scratch']
  %s0 = inlined_call_operand.hbm [shape: f32[8,32,400], index: 0, kind: input, shape index: {}]
  %s1 = inlined_call_operand.hbm [shape: f32[2,8,32], index: 1, kind: output, shape index: {}]
  %s2 = sld [smem:[#allocation0]]
  $region41: #{tpu_custom_call.1} parent=0
    _
  %s4 = ssub.s32 1, %s2
  %s5 = scalar_select 0, %s4, %s2
  $region1: #{tpu_custom_call.1} parent=0
    #allocation2 [shape = 'u8[524288]{0}', space=vmem, size = 0x80000, scoped, tag = 'input window, operand 0']
    #allocation3 [shape = 's32[2]{0}', space=sflag, size = 0x8, scoped, tag = 'scoped memory for tpu_custom_call.1']
    #allocation4 [shape = 's32[2]{0}', space=sflag, size = 0x8, scoped, tag = 'scoped memory for tpu_custom_call.1']
    #allocation5 [shape = 'u8[8192]{0}', space=vmem, size = 0x2000, scoped, tag = 'output window, operand 0']
    %6 = vsyncpa [#allocation3], 0
    %s7 = scalar_lea.sflag [#allocation3], 1
    %8 = vsyncpa %s7, 0
    %9 = vsyncpa [#allocation4], 0
    %s10 = scalar_lea.sflag [#allocation4], 1
    %11 = vsyncpa %s10, 0
    loop: start=0, step=1, limit=4
    $region2: #{tpu_custom_call.1} parent=1 // loop_pre_header
      _
    $region3: #{tpu_custom_call.1} parent=1 // loop_header
      %s13 = sphi 0, %s17
      %p14 = scmp.ge.s32.totalorder %s13, 4
      %s23 = sphi 0, %s25
      %s26 = sphi 0, %s23
      %s27 = sphi 0, %s26
      %s43 = sphi 0, %s27
      %s49 = sphi 0, %s51
      %s52 = sphi 0, %s49
      %s53 = sphi 0, %s52
      %s69 = sphi 0, %s53
    $region4: #{tpu_custom_call.1} parent=1 // loop_header_branch
      %16 = sbr.rel (%p14) target = $region8
    $region5: #{tpu_custom_call.1} parent=1 // loop_body
      %s18 = ssub.s32 %s13, 1
      %s19 = ssub.s32 %s13, 2
      %s20 = sadd.s32 %s13, 1
      %s21 = ssub.s32 %s13, %s20
      %p22 = scmp.eq.s32.totalorder %s21, 0
      %s24 = sadd.s32 %s23, 1
      %s25 = scalar_select %p22, %s23, %s24
      %p28 = pneg %p22
      %p29 = scmp.eq.s32.totalorder %s13, 1
      %p30 = por %p28, %p29
      %p31 = scmp.ne.s32.totalorder %s23, %s26
      %p32 = scmp.eq.s32.totalorder %s13, 0
      %p33 = por %p31, %p32
      %p34 = scmp.ne.s32.totalorder %s23, %s26
      %p35 = scmp.eq.s32.totalorder %s18, 1
      %p36 = por %p34, %p35
      %p37 = scmp.ne.s32.totalorder %s26, %s27
      %p38 = scmp.eq.s32.totalorder %s18, 0
      %p39 = por %p37, %p38
      %p40 = scmp.ne.s32.totalorder %s26, %s27
      %p41 = scmp.eq.s32.totalorder %s19, 1
      %p42 = por %p40, %p41
      %p44 = scmp.ne.s32.totalorder %s27, %s43
      %p45 = scmp.eq.s32.totalorder %s19, 0
      %p46 = por %p44, %p45
      %s47 = ssub.s32 %s13, %s20
      %p48 = scmp.eq.s32.totalorder %s47, 0
      %s50 = sadd.s32 %s49, 1
      %s51 = scalar_select %p48, %s49, %s50
      %p54 = pneg %p48
      %p55 = scmp.eq.s32.totalorder %s13, 1
      %p56 = por %p54, %p55
      %p57 = scmp.ne.s32.totalorder %s49, %s52
      %p58 = scmp.eq.s32.totalorder %s13, 0
      %p59 = por %p57, %p58
      %p60 = scmp.ne.s32.totalorder %s49, %s52
      %p61 = scmp.eq.s32.totalorder %s18, 1
      %p62 = por %p60, %p61
      %p63 = scmp.ne.s32.totalorder %s52, %s53
      %p64 = scmp.eq.s32.totalorder %s18, 0
      %p65 = por %p63, %p64
      %p66 = scmp.ne.s32.totalorder %s52, %s53
      %p67 = scmp.eq.s32.totalorder %s19, 1
      %p68 = por %p66, %p67
      %p70 = scmp.ne.s32.totalorder %s53, %s69
      %p71 = scmp.eq.s32.totalorder %s19, 0
      %p72 = por %p70, %p71
      %p73 = scmp.le.s32.totalorder 1, %s13
      %p74 = scmp.lt.s32.totalorder %s13, 3
      %p75 = pnand %p73, %p74
      %p76 = pneg %p75
      // Predicated region
      $region9: #{tpu_custom_call.1} parent=5 // pred_check
        _
      $region10: #{tpu_custom_call.1} parent=5 // pred_check_branch
        %78 = sbr.rel (%p75) target = $region12
      $region11: #{tpu_custom_call.1} parent=5 // pred_region
        %s79 = ssub.s32 %s13, 1
      $region12: #{tpu_custom_call.1} parent=5 // pred_fallthru
        _
      %p80 = scmp.lt.s32.totalorder %s13, 2
      // Predicated region
      $region13: #{tpu_custom_call.1} parent=5 // pred_check
        %p81 = pneg %p80
      $region14: #{tpu_custom_call.1} parent=5 // pred_check_branch
        %83 = sbr.rel (%p81) target = $region16
      $region15: #{tpu_custom_call.1} parent=5 // pred_region
        // Predicated region
        $region17: #{tpu_custom_call.1} parent=15 // pred_check
          %p84 = pneg %p33
        $region18: #{tpu_custom_call.1} parent=15 // pred_check_branch
          %86 = sbr.rel (%p84) target = $region20
        $region19: #{tpu_custom_call.1} parent=15 // pred_region
          %s87 = sand.u32 %s23, 1
          %s88 = scalar_lea.sflag [#allocation3], %s87
          %s89 = sand.u32 %s23, 1
          %s90 = smul.addr %s89, 512
          %s91 = scalar_lea.vmem [#allocation2], %s90
          %s92 = smul.u32 2, %s13
          %s94 = ssub.s32 8192, 8192
          %95 = vsyncadd %s88, %s94
          %s96 = smul.addr %s92, 128
          %s97 = scalar_lea.hbm %s0, %s96
          %s98 = sshll.u32 %s91, 4
          %s99 = int_to_ptr.vmem [resolvable:$true] %s98
          %104 = dma.hbm_to_vmem [thread:$0]  %s97, 8192, %s99, %s88, 512, 256, 16
        $region20: #{tpu_custom_call.1} parent=15 // pred_fallthru
          _
      $region16: #{tpu_custom_call.1} parent=5 // pred_fallthru
        _
      %p105 = scmp.le.s32.totalorder 1, %s13
      %p106 = scmp.lt.s32.totalorder %s13, 3
      %p107 = pnand %p105, %p106
      %p108 = pneg %p107
      // Predicated region
      $region21: #{tpu_custom_call.1} parent=5 // pred_check
        _
      $region22: #{tpu_custom_call.1} parent=5 // pred_check_branch
        %110 = sbr.rel (%p107) target = $region24
      $region23: #{tpu_custom_call.1} parent=5 // pred_region
        %s111 = ssub.s32 %s13, 1
        %s112 = sand.u32 %s26, 1
        %s113 = scalar_lea.sflag [#allocation3], %s112
        %s114 = sand.u32 %s26, 1
        %s115 = smul.addr %s114, 512
        %s116 = scalar_lea.vmem [#allocation2], %s115
        // Predicated region
        $region25: #{tpu_custom_call.1} parent=23 // pred_check
          %p117 = pneg %p39
        $region26: #{tpu_custom_call.1} parent=23 // pred_check_branch
          %119 = sbr.rel (%p117) target = $region28
        $region27: #{tpu_custom_call.1} parent=23 // pred_region
          %120 = dma.done %s113, 8192
        $region28: #{tpu_custom_call.1} parent=23 // pred_fallthru
          _
        %s121 = sand.u32 %s26, 1
        %s122 = scalar_lea.sflag [#allocation3], %s121
        %s123 = sand.u32 %s26, 1
        %s124 = smul.addr %s123, 512
        %s125 = scalar_lea.vmem [#allocation2], %s124
        %p126 = pneg %p39
        %p127 = pneg %p36
        %p128 = pneg %p65
        %p129 = pneg %p62
        %s130 = sand.u32 %s52, 1
        %s131 = scalar_lea.sflag [#allocation4], %s130
        %s132 = sand.u32 %s52, 1
        %s133 = smul.addr %s132, 8
        %s134 = scalar_lea.vmem [#allocation5], %s133
        %s135 = smul.u32 2, %s18
        %v136 = vld [vmem:[%s116] sm:$0xff]
        %v137 = vld [vmem:[%s116 + $0x8] sm:$0xff]
        %v138 = vld [vmem:[%s116 + $0x10] sm:$0xff]
        %v139 = vld [vmem:[%s116 + $0x18] sm:$0xff]
        %v140 = vld [vmem:[%s116 + $0x20] sm:$0xff]
        %v141 = vld [vmem:[%s116 + $0x28] sm:$0xff]
        %v142 = vld [vmem:[%s116 + $0x30] sm:$0xff]
        %v143 = vld [vmem:[%s116 + $0x38] sm:$0xff]
        %v144 = vld [vmem:[%s116 + $0x40] sm:$0xff]
        %v145 = vld [vmem:[%s116 + $0x48] sm:$0xff]
        %v146 = vld [vmem:[%s116 + $0x50] sm:$0xff]
        %v147 = vld [vmem:[%s116 + $0x58] sm:$0xff]
        %v148 = vld [vmem:[%s116 + $0x60] sm:$0xff]
        %v149 = vld [vmem:[%s116 + $0x68] sm:$0xff]
        %v150 = vld [vmem:[%s116 + $0x70] sm:$0xff]
        %v151 = vld [vmem:[%s116 + $0x78] sm:$0xff]
        %v152 = vld [vmem:[%s116 + $0x80] sm:$0xff]
        %v153 = vld [vmem:[%s116 + $0x88] sm:$0xff]
        %v154 = vld [vmem:[%s116 + $0x90] sm:$0xff]
        %v155 = vld [vmem:[%s116 + $0x98] sm:$0xff]
        %v156 = vld [vmem:[%s116 + $0xa0] sm:$0xff]
        %v157 = vld [vmem:[%s116 + $0xa8] sm:$0xff]
        %v158 = vld [vmem:[%s116 + $0xb0] sm:$0xff]
        %v159 = vld [vmem:[%s116 + $0xb8] sm:$0xff]
        %v160 = vld [vmem:[%s116 + $0xc0] sm:$0xff]
        %v161 = vld [vmem:[%s116 + $0xc8] sm:$0xff]
        %v162 = vld [vmem:[%s116 + $0xd0] sm:$0xff]
        %v163 = vld [vmem:[%s116 + $0xd8] sm:$0xff]
        %v164 = vld [vmem:[%s116 + $0xe0] sm:$0xff]
        %v165 = vld [vmem:[%s116 + $0xe8] sm:$0xff]
        %v166 = vld [vmem:[%s116 + $0xf0] sm:$0xff]
        %v167 = vld [vmem:[%s116 + $0xf8] sm:$0xff]
        %v168 = vld [vmem:[%s116 + $0x100] sm:$0xff]
        %v169 = vld [vmem:[%s116 + $0x108] sm:$0xff]
        %v170 = vld [vmem:[%s116 + $0x110] sm:$0xff]
        %v171 = vld [vmem:[%s116 + $0x118] sm:$0xff]
        %v172 = vld [vmem:[%s116 + $0x120] sm:$0xff]
        %v173 = vld [vmem:[%s116 + $0x128] sm:$0xff]
        %v174 = vld [vmem:[%s116 + $0x130] sm:$0xff]
        %v175 = vld [vmem:[%s116 + $0x138] sm:$0xff]
        %v176 = vld [vmem:[%s116 + $0x140] sm:$0xff]
        %v177 = vld [vmem:[%s116 + $0x148] sm:$0xff]
        %v178 = vld [vmem:[%s116 + $0x150] sm:$0xff]
        %v179 = vld [vmem:[%s116 + $0x158] sm:$0xff]
        %v180 = vld [vmem:[%s116 + $0x160] sm:$0xff]
        %v181 = vld [vmem:[%s116 + $0x168] sm:$0xff]
        %v182 = vld [vmem:[%s116 + $0x170] sm:$0xff]
        %v183 = vld [vmem:[%s116 + $0x178] sm:$0xff]
        %v184 = vld [vmem:[%s116 + $0x180] sm:$0xff]
        %v185 = vld [vmem:[%s116 + $0x188] sm:$0xff]
        %v186 = vld [vmem:[%s116 + $0x190] sm:$0xff]
        %v187 = vld [vmem:[%s116 + $0x198] sm:$0xff]
        %v188 = vld [vmem:[%s116 + $0x1a0] sm:$0xff]
        %v189 = vld [vmem:[%s116 + $0x1a8] sm:$0xff]
        %v190 = vld [vmem:[%s116 + $0x1b0] sm:$0xff]
        %v191 = vld [vmem:[%s116 + $0x1b8] sm:$0xff]
        %v192 = vld [vmem:[%s116 + $0x1c0] sm:$0xff]
        %v193 = vld [vmem:[%s116 + $0x1c8] sm:$0xff]
        %v194 = vld [vmem:[%s116 + $0x1d0] sm:$0xff]
        %v195 = vld [vmem:[%s116 + $0x1d8] sm:$0xff]
        %v196 = vld [vmem:[%s116 + $0x1e0] sm:$0xff]
        %v197 = vld [vmem:[%s116 + $0x1e8] sm:$0xff]
        %v198 = vld [vmem:[%s116 + $0x1f0] sm:$0xff]
        %v199 = vld [vmem:[%s116 + $0x1f8] sm:$0xff]
        %v200 = vlaneseq
        %v201 = vand.u32 %v200, 127
        %v202 = vadd.s32 %v201, 128
        %s203 = smul.u32 %s18, 256
        %v204 = vstv %s203
        %v205 = vadd.s32 %v204, %v201
        %v206 = vadd.s32 %v204, %v202
        %vm207 = vcmp.lt.s32.totalorder %v205, 400
        %vm208 = vcmp.lt.s32.totalorder %v206, 400
        %v209 = vsel %vm207, %v136, -inf
        %v210 = vsel %vm208, %v137, -inf
        %v211 = vsel %vm207, %v138, -inf
        %v212 = vsel %vm208, %v139, -inf
        %v213 = vsel %vm207, %v140, -inf
        %v214 = vsel %vm208, %v141, -inf
        %v215 = vsel %vm207, %v142, -inf
        %v216 = vsel %vm208, %v143, -inf
        %v217 = vsel %vm207, %v144, -inf
        %v218 = vsel %vm208, %v145, -inf
        %v219 = vsel %vm207, %v146, -inf
        %v220 = vsel %vm208, %v147, -inf
        %v221 = vsel %vm207, %v148, -inf
        %v222 = vsel %vm208, %v149, -inf
        %v223 = vsel %vm207, %v150, -inf
        %v224 = vsel %vm208, %v151, -inf
        %v225 = vsel %vm207, %v152, -inf
        %v226 = vsel %vm208, %v153, -inf
        %v227 = vsel %vm207, %v154, -inf
        %v228 = vsel %vm208, %v155, -inf
        %v229 = vsel %vm207, %v156, -inf
        %v230 = vsel %vm208, %v157, -inf
        %v231 = vsel %vm207, %v158, -inf
        %v232 = vsel %vm208, %v159, -inf
        %v233 = vsel %vm207, %v160, -inf
        %v234 = vsel %vm208, %v161, -inf
        %v235 = vsel %vm207, %v162, -inf
        %v236 = vsel %vm208, %v163, -inf
        %v237 = vsel %vm207, %v164, -inf
        %v238 = vsel %vm208, %v165, -inf
        %v239 = vsel %vm207, %v166, -inf
        %v240 = vsel %vm208, %v167, -inf
        %v241 = vsel %vm207, %v168, -inf
        %v242 = vsel %vm208, %v169, -inf
        %v243 = vsel %vm207, %v170, -inf
        %v244 = vsel %vm208, %v171, -inf
        %v245 = vsel %vm207, %v172, -inf
        %v246 = vsel %vm208, %v173, -inf
        %v247 = vsel %vm207, %v174, -inf
        %v248 = vsel %vm208, %v175, -inf
        %v249 = vsel %vm207, %v176, -inf
        %v250 = vsel %vm208, %v177, -inf
        %v251 = vsel %vm207, %v178, -inf
        %v252 = vsel %vm208, %v179, -inf
        %v253 = vsel %vm207, %v180, -inf
        %v254 = vsel %vm208, %v181, -inf
        %v255 = vsel %vm207, %v182, -inf
        %v256 = vsel %vm208, %v183, -inf
        %v257 = vsel %vm207, %v184, -inf
        %v258 = vsel %vm208, %v185, -inf
        %v259 = vsel %vm207, %v186, -inf
        %v260 = vsel %vm208, %v187, -inf
        %v261 = vsel %vm207, %v188, -inf
        %v262 = vsel %vm208, %v189, -inf
        %v263 = vsel %vm207, %v190, -inf
        %v264 = vsel %vm208, %v191, -inf
        %v265 = vsel %vm207, %v192, -inf
        %v266 = vsel %vm208, %v193, -inf
        %v267 = vsel %vm207, %v194, -inf
        %v268 = vsel %vm208, %v195, -inf
        %v269 = vsel %vm207, %v196, -inf
        %v270 = vsel %vm208, %v197, -inf
        %v271 = vsel %vm207, %v198, -inf
        %v272 = vsel %vm208, %v199, -inf
        %v273 = vmax.f32 %v209, %v210
        %274 = vmax.xlane.f32.xlu0 %v273
        %v275 = vpop.xlane.xlu0 %274
        %v276 = vmax.f32 %v211, %v212
        %277 = vmax.xlane.f32.xlu0 %v276
        %v278 = vpop.xlane.xlu0 %277
        %v279 = vmax.f32 %v213, %v214
        %280 = vmax.xlane.f32.xlu0 %v279
        %v281 = vpop.xlane.xlu0 %280
        %v282 = vmax.f32 %v215, %v216
        %283 = vmax.xlane.f32.xlu0 %v282
        %v284 = vpop.xlane.xlu0 %283
        %v285 = vmax.f32 %v217, %v218
        %286 = vmax.xlane.f32.xlu0 %v285
        %v287 = vpop.xlane.xlu0 %286
        %v288 = vmax.f32 %v219, %v220
        %289 = vmax.xlane.f32.xlu0 %v288
        %v290 = vpop.xlane.xlu0 %289
        %v291 = vmax.f32 %v221, %v222
        %292 = vmax.xlane.f32.xlu0 %v291
        %v293 = vpop.xlane.xlu0 %292
        %v294 = vmax.f32 %v223, %v224
        %295 = vmax.xlane.f32.xlu0 %v294
        %v296 = vpop.xlane.xlu0 %295
        %v297 = vmax.f32 %v225, %v226
        %298 = vmax.xlane.f32.xlu0 %v297
        %v299 = vpop.xlane.xlu0 %298
        %v300 = vmax.f32 %v227, %v228
        %301 = vmax.xlane.f32.xlu0 %v300
        %v302 = vpop.xlane.xlu0 %301
        %v303 = vmax.f32 %v229, %v230
        %304 = vmax.xlane.f32.xlu0 %v303
        %v305 = vpop.xlane.xlu0 %304
        %v306 = vmax.f32 %v231, %v232
        %307 = vmax.xlane.f32.xlu0 %v306
        %v308 = vpop.xlane.xlu0 %307
        %v309 = vmax.f32 %v233, %v234
        %310 = vmax.xlane.f32.xlu0 %v309
        %v311 = vpop.xlane.xlu0 %310
        %v312 = vmax.f32 %v235, %v236
        %313 = vmax.xlane.f32.xlu0 %v312
        %v314 = vpop.xlane.xlu0 %313
        %v315 = vmax.f32 %v237, %v238
        %316 = vmax.xlane.f32.xlu0 %v315
        %v317 = vpop.xlane.xlu0 %316
        %v318 = vmax.f32 %v239, %v240
        %319 = vmax.xlane.f32.xlu0 %v318
        %v320 = vpop.xlane.xlu0 %319
        %v321 = vmax.f32 %v241, %v242
        %322 = vmax.xlane.f32.xlu0 %v321
        %v323 = vpop.xlane.xlu0 %322
        %v324 = vmax.f32 %v243, %v244
        %325 = vmax.xlane.f32.xlu0 %v324
        %v326 = vpop.xlane.xlu0 %325
        %v327 = vmax.f32 %v245, %v246
        %328 = vmax.xlane.f32.xlu0 %v327
        %v329 = vpop.xlane.xlu0 %328
        %v330 = vmax.f32 %v247, %v248
        %331 = vmax.xlane.f32.xlu0 %v330
        %v332 = vpop.xlane.xlu0 %331
        %v333 = vmax.f32 %v249, %v250
        %334 = vmax.xlane.f32.xlu0 %v333
        %v335 = vpop.xlane.xlu0 %334
        %v336 = vmax.f32 %v251, %v252
        %337 = vmax.xlane.f32.xlu0 %v336
        %v338 = vpop.xlane.xlu0 %337
        %v339 = vmax.f32 %v253, %v254
        %340 = vmax.xlane.f32.xlu0 %v339
        %v341 = vpop.xlane.xlu0 %340
        %v342 = vmax.f32 %v255, %v256
        %343 = vmax.xlane.f32.xlu0 %v342
        %v344 = vpop.xlane.xlu0 %343
        %v345 = vmax.f32 %v257, %v258
        %346 = vmax.xlane.f32.xlu0 %v345
        %v347 = vpop.xlane.xlu0 %346
        %v348 = vmax.f32 %v259, %v260
        %349 = vmax.xlane.f32.xlu0 %v348
        %v350 = vpop.xlane.xlu0 %349
        %v351 = vmax.f32 %v261, %v262
        %352 = vmax.xlane.f32.xlu0 %v351
        %v353 = vpop.xlane.xlu0 %352
        %v354 = vmax.f32 %v263, %v264
        %355 = vmax.xlane.f32.xlu0 %v354
        %v356 = vpop.xlane.xlu0 %355
        %v357 = vmax.f32 %v265, %v266
        %358 = vmax.xlane.f32.xlu0 %v357
        %v359 = vpop.xlane.xlu0 %358
        %v360 = vmax.f32 %v267, %v268
        %361 = vmax.xlane.f32.xlu0 %v360
        %v362 = vpop.xlane.xlu0 %361
        %v363 = vmax.f32 %v269, %v270
        %364 = vmax.xlane.f32.xlu0 %v363
        %v365 = vpop.xlane.xlu0 %364
        %v366 = vmax.f32 %v271, %v272
        %367 = vmax.xlane.f32.xlu0 %v366
        %v368 = vpop.xlane.xlu0 %367
        %v401 = vlaneseq
        %v402 = vshrl.u32 %v401, 7
        %v403 = vsub.s32 %v201, %v402
        %v404 = vrot.slane %v275, %v403
        %v405 = vadd.s32 %v201, 4294967288
        %v406 = vlaneseq
        %v407 = vshrl.u32 %v406, 7
        %v408 = vsub.s32 %v405, %v407
        %v409 = vrot.slane %v278, %v408
        %vm410 = vcmask 130112
        %v411 = vsel %vm410, %v409, %v404
        %v412 = vadd.s32 %v201, 4294967280
        %v413 = vlaneseq
        %v414 = vshrl.u32 %v413, 7
        %v415 = vsub.s32 %v412, %v414
        %v416 = vrot.slane %v281, %v415
        %vm417 = vcmask 195712
        %v418 = vsel %vm417, %v416, %v411
        %v419 = vadd.s32 %v201, 4294967272
        %v420 = vlaneseq
        %v421 = vshrl.u32 %v420, 7
        %v422 = vsub.s32 %v419, %v421
        %v423 = vrot.slane %v284, %v422
        %vm424 = vcmask 261312
        %v425 = vsel %vm424, %v423, %v418
        %v426 = vlaneseq
        %v427 = vshrl.u32 %v426, 7
        %v428 = vsub.s32 %v201, %v427
        %v429 = vrot.slane %v287, %v428
        %v430 = vlaneseq
        %v431 = vshrl.u32 %v430, 7
        %v432 = vsub.s32 %v405, %v431
        %v433 = vrot.slane %v290, %v432
        %v434 = vsel %vm410, %v433, %v429
        %v435 = vlaneseq
        %v436 = vshrl.u32 %v435, 7
        %v437 = vsub.s32 %v412, %v436
        %v438 = vrot.slane %v293, %v437
        %v439 = vsel %vm417, %v438, %v434
        %v440 = vlaneseq
        %v441 = vshrl.u32 %v440, 7
        %v442 = vsub.s32 %v419, %v441
        %v443 = vrot.slane %v296, %v442
        %v444 = vsel %vm424, %v443, %v439
        %v445 = vlaneseq
        %v446 = vshrl.u32 %v445, 7
        %v447 = vsub.s32 %v201, %v446
        %v448 = vrot.slane %v299, %v447
        %v449 = vlaneseq
        %v450 = vshrl.u32 %v449, 7
        %v451 = vsub.s32 %v405, %v450
        %v452 = vrot.slane %v302, %v451
        %v453 = vsel %vm410, %v452, %v448
        %v454 = vlaneseq
        %v455 = vshrl.u32 %v454, 7
        %v456 = vsub.s32 %v412, %v455
        %v457 = vrot.slane %v305, %v456
        %v458 = vsel %vm417, %v457, %v453
        %v459 = vlaneseq
        %v460 = vshrl.u32 %v459, 7
        %v461 = vsub.s32 %v419, %v460
        %v462 = vrot.slane %v308, %v461
        %v463 = vsel %vm424, %v462, %v458
        %v464 = vlaneseq
        %v465 = vshrl.u32 %v464, 7
        %v466 = vsub.s32 %v201, %v465
        %v467 = vrot.slane %v311, %v466
        %v468 = vlaneseq
        %v469 = vshrl.u32 %v468, 7
        %v470 = vsub.s32 %v405, %v469
        %v471 = vrot.slane %v314, %v470
        %v472 = vsel %vm410, %v471, %v467
        %v473 = vlaneseq
        %v474 = vshrl.u32 %v473, 7
        %v475 = vsub.s32 %v412, %v474
        %v476 = vrot.slane %v317, %v475
        %v477 = vsel %vm417, %v476, %v472
        %v478 = vlaneseq
        %v479 = vshrl.u32 %v478, 7
        %v480 = vsub.s32 %v419, %v479
        %v481 = vrot.slane %v320, %v480
        %v482 = vsel %vm424, %v481, %v477
        %v483 = vlaneseq
        %v484 = vshrl.u32 %v483, 7
        %v485 = vsub.s32 %v201, %v484
        %v486 = vrot.slane %v323, %v485
        %v487 = vlaneseq
        %v488 = vshrl.u32 %v487, 7
        %v489 = vsub.s32 %v405, %v488
        %v490 = vrot.slane %v326, %v489
        %v491 = vsel %vm410, %v490, %v486
        %v492 = vlaneseq
        %v493 = vshrl.u32 %v492, 7
        %v494 = vsub.s32 %v412, %v493
        %v495 = vrot.slane %v329, %v494
        %v496 = vsel %vm417, %v495, %v491
        %v497 = vlaneseq
        %v498 = vshrl.u32 %v497, 7
        %v499 = vsub.s32 %v419, %v498
        %v500 = vrot.slane %v332, %v499
        %v501 = vsel %vm424, %v500, %v496
        %v502 = vlaneseq
        %v503 = vshrl.u32 %v502, 7
        %v504 = vsub.s32 %v201, %v503
        %v505 = vrot.slane %v335, %v504
        %v506 = vlaneseq
        %v507 = vshrl.u32 %v506, 7
        %v508 = vsub.s32 %v405, %v507
        %v509 = vrot.slane %v338, %v508
        %v510 = vsel %vm410, %v509, %v505
        %v511 = vlaneseq
        %v512 = vshrl.u32 %v511, 7
        %v513 = vsub.s32 %v412, %v512
        %v514 = vrot.slane %v341, %v513
        %v515 = vsel %vm417, %v514, %v510
        %v516 = vlaneseq
        %v517 = vshrl.u32 %v516, 7
        %v518 = vsub.s32 %v419, %v517
        %v519 = vrot.slane %v344, %v518
        %v520 = vsel %vm424, %v519, %v515
        %v521 = vlaneseq
        %v522 = vshrl.u32 %v521, 7
        %v523 = vsub.s32 %v201, %v522
        %v524 = vrot.slane %v347, %v523
        %v525 = vlaneseq
        %v526 = vshrl.u32 %v525, 7
        %v527 = vsub.s32 %v405, %v526
        %v528 = vrot.slane %v350, %v527
        %v529 = vsel %vm410, %v528, %v524
        %v530 = vlaneseq
        %v531 = vshrl.u32 %v530, 7
        %v532 = vsub.s32 %v412, %v531
        %v533 = vrot.slane %v353, %v532
        %v534 = vsel %vm417, %v533, %v529
        %v535 = vlaneseq
        %v536 = vshrl.u32 %v535, 7
        %v537 = vsub.s32 %v419, %v536
        %v538 = vrot.slane %v356, %v537
        %v539 = vsel %vm424, %v538, %v534
        %v540 = vlaneseq
        %v541 = vshrl.u32 %v540, 7
        %v542 = vsub.s32 %v201, %v541
        %v543 = vrot.slane %v359, %v542
        %v544 = vlaneseq
        %v545 = vshrl.u32 %v544, 7
        %v546 = vsub.s32 %v405, %v545
        %v547 = vrot.slane %v362, %v546
        %v548 = vsel %vm410, %v547, %v543
        %v549 = vlaneseq
        %v550 = vshrl.u32 %v549, 7
        %v551 = vsub.s32 %v412, %v550
        %v552 = vrot.slane %v365, %v551
        %v553 = vsel %vm417, %v552, %v548
        %v554 = vlaneseq
        %v555 = vshrl.u32 %v554, 7
        %v556 = vsub.s32 %v419, %v555
        %v557 = vrot.slane %v368, %v556
        %v558 = vsel %vm424, %v557, %v553
        %vm559 = vcmask 1041409
        %v560 = vsel %vm559, %v444, %v425
        %vm561 = vcmask 1042434
        %v562 = vsel %vm561, %v463, %v560
        %vm563 = vcmask 1043459
        %v564 = vsel %vm563, %v482, %v562
        %vm565 = vcmask 1044484
        %v566 = vsel %vm565, %v501, %v564
        %vm567 = vcmask 1045509
        %v568 = vsel %vm567, %v520, %v566
        %vm569 = vcmask 1046534
        %v570 = vsel %vm569, %v539, %v568
        %vm571 = vcmask 1047559
        %v572 = vsel %vm571, %v558, %v570
        %vm574 = vcmask 261120
        %575 = vst.msk [vmem:[%s134] sm:$0xff] %vm574, %v572
        %s576 = sand.u32 %s52, 1
        %s577 = scalar_lea.sflag [#allocation4], %s576
        %s578 = sand.u32 %s52, 1
        %s579 = smul.addr %s578, 8
        %s580 = scalar_lea.vmem [#allocation5], %s579
        // Predicated region
        $region29: #{tpu_custom_call.1} parent=23 // pred_check
          %p581 = pneg %p62
        $region30: #{tpu_custom_call.1} parent=23 // pred_check_branch
          %583 = sbr.rel (%p581) target = $region32
        $region31: #{tpu_custom_call.1} parent=23 // pred_region
          %s585 = ssub.s32 128, 128
          %586 = vsyncadd %s577, %s585
          %s587 = smul.addr %s18, 128
          %s588 = scalar_lea.hbm %s1, %s587
          %s590 = sshll.u32 %s580, 4
          %s591 = int_to_ptr.vmem [resolvable:$true] %s590
          %593 = dma.vmem_to_hbm [thread:$0]  %s591, 128, %s588, %s577
        $region32: #{tpu_custom_call.1} parent=23 // pred_fallthru
          _
      $region24: #{tpu_custom_call.1} parent=5 // pred_fallthru
        _
      %p594 = scmp.le.s32.totalorder 2, %s13
      // Predicated region
      $region33: #{tpu_custom_call.1} parent=5 // pred_check
        %p595 = pneg %p594
      $region34: #{tpu_custom_call.1} parent=5 // pred_check_branch
        %597 = sbr.rel (%p595) target = $region36
      $region35: #{tpu_custom_call.1} parent=5 // pred_region
        %s598 = ssub.s32 %s13, 2
        // Predicated region
        $region37: #{tpu_custom_call.1} parent=35 // pred_check
          %p599 = pneg %p68
        $region38: #{tpu_custom_call.1} parent=35 // pred_check_branch
          %601 = sbr.rel (%p599) target = $region40
        $region39: #{tpu_custom_call.1} parent=35 // pred_region
          %s602 = sand.u32 %s53, 1
          %s603 = scalar_lea.sflag [#allocation4], %s602
          %s604 = sand.u32 %s53, 1
          %s605 = smul.addr %s604, 8
          %s606 = scalar_lea.vmem [#allocation5], %s605
          %607 = dma.done %s603, 128
        $region40: #{tpu_custom_call.1} parent=35 // pred_fallthru
          _
      $region36: #{tpu_custom_call.1} parent=5 // pred_fallthru
        _
    $region6: #{tpu_custom_call.1} parent=1 // loop_footer
      %s17 = sadd.s32 1, %s13
    $region7: #{tpu_custom_call.1} parent=1 // loop_footer_branch
      %12 = sbr.rel target = $region3
    $region8: #{tpu_custom_call.1} parent=1 // loop_exit
      _
    %608 = vsyncpa [#allocation3], 1
    %s609 = scalar_lea.sflag [#allocation3], 1
    %610 = vsyncpa %s609, 1
    %611 = vsyncpa [#allocation4], 1
    %s612 = scalar_lea.sflag [#allocation4], 1
    %613 = vsyncpa %s612, 1

</llo_original>
